<compile_context>
chip_gen: v6e
topology: v6e:2x2x1
jax: 0.10.0
libtpu: 0.0.40
codegen_flags: <defaults>
</compile_context>

<pallas_src>
import jax
import jax.numpy as jnp
from jax import lax
from jax.experimental import pallas as pl
from jax.experimental.pallas import tpu as pltpu

EPS = 1e-5


# --------------------------------------------------------------------------
# Budget / tiling helpers
# --------------------------------------------------------------------------
def _sublane_granule(dtype):
    """Channel-block granularity: 8 for 4-byte, 16 for bf16, 32 for 1-byte."""
    return max(8, 32 // jnp.dtype(dtype).itemsize)


def _budgets():
    """(target block bytes, vmem_limit_bytes) — generation aware."""
    try:
        info = pltpu.get_tpu_info()
        vmem_phys = int(getattr(info, "vmem_capacity_bytes", 0)) or (64 << 20)
    except Exception:  # pragma: no cover - conservative default (v7x size)
        vmem_phys = 64 << 20
    # ~65% of physical VMEM for this call (v7x: ~41 MiB, v5e/v6e: ~83 MiB).
    vmem_limit = int(min(max(int(0.65 * vmem_phys), 16 << 20), 100 << 20))
    # Leave room for: 2x double-buffered input + output blocks plus f32
    # working copies of the block inside the kernel.
    target_block = int(min(8 << 20, vmem_limit // 10))
    return target_block, vmem_limit


def _pick_block_channels(C, per_ch_bytes, sub, target_bytes):
    """Channel block for the fused (N, blk_c, HW) kernel, or None if even the
    minimum legal block does not fit the budget (-> two-phase fallback)."""
    min_blk = C if C < sub else sub
    if min_blk * per_ch_bytes > target_bytes:
        return None
    blk = max(min_blk, (target_bytes // per_ch_bytes) // sub * sub)
    if blk >= C:
        # Whole problem fits one block: still split channels so a dual-TC
        # chip (v7x) gets >= 2 grid steps, when the sublane rules allow it.
        if C >= 2 * sub:
            return max(sub, (C // 2) // sub * sub)
        return C
    return blk


# --------------------------------------------------------------------------
# Fused single-pass kernel (primary path)
# --------------------------------------------------------------------------
def _make_fused_kernel(half1, blk_c, nblk, n, hw):
    inv_hw = 1.0 / float(hw)
    inv_nhw = 1.0 / float(n * hw)

    def kernel(x_ref, g_ref, b_ref, o_ref):
        j = pl.program_id(0)
        x = x_ref[...].astype(jnp.float32)                # (N, blk_c, HW)

        # Single-pass partial stats: per-(n, c) sums over HW (lane reduce).
        s_nc = jnp.sum(x, axis=-1, keepdims=True)         # (N, blk_c, 1)
        q_nc = jnp.sum(x * x, axis=-1, keepdims=True)

        # InstanceNorm stats: per (n, c).
        mean_in = s_nc * inv_hw
        var_in = q_nc * inv_hw - mean_in * mean_in

        # BatchNorm stats: per channel (cheap VPU reduce over N of partials).
        s_c = jnp.sum(s_nc, axis=0, keepdims=True)        # (1, blk_c, 1)
        q_c = jnp.sum(q_nc, axis=0, keepdims=True)
        mean_bn = s_c * inv_nhw
        var_bn = q_c * inv_nhw - mean_bn * mean_bn

        # Per-channel IN vs BN selection by global channel index.
        ch = j * blk_c + lax.broadcasted_iota(jnp.int32, (blk_c, 1), 0)
        is_in = (ch < half1)[None]                        # (1, blk_c, 1)
        mean = jnp.where(is_in, mean_in, mean_bn)         # (N, blk_c, 1)
        var = jnp.maximum(jnp.where(is_in, var_in, var_bn), 0.0)

        # gamma/beta are resident full-length (C_pad, 1) refs; slice block.
        if nblk == 1:
            g = g_ref[...]
            b = b_ref[...]
        else:
            start = pl.multiple_of(j * blk_c, 8)
            g = g_ref[pl.ds(start, blk_c), :]
            b = b_ref[pl.ds(start, blk_c), :]

        scale = g[None] * lax.rsqrt(var + EPS)            # (N, blk_c, 1)
        shift = b[None] - mean * scale
        o_ref[...] = (x * scale + shift).astype(o_ref.dtype)

    return kernel


# --------------------------------------------------------------------------
# Two-phase fallback (large N*HW): stats kernel + apply kernel
# --------------------------------------------------------------------------
def _stats_kernel(x_ref, s_ref, q_ref):
    x = x_ref[...].astype(jnp.float32)                    # (blk_n, blk_c, HW)
    s_ref[...] = jnp.sum(x, axis=-1, keepdims=True)
    q_ref[...] = jnp.sum(x * x, axis=-1, keepdims=True)


def _apply_kernel(x_ref, scale_ref, shift_ref, o_ref):
    x = x_ref[...].astype(jnp.float32)
    o_ref[...] = (x * scale_ref[...] + shift_ref[...]).astype(o_ref.dtype)


# --------------------------------------------------------------------------
# Wrapper
# --------------------------------------------------------------------------
def ibn_forward(x_nchw, gamma_in, beta_in, gamma_bn, beta_bn, half1,
                *, target_block_bytes=None):
    N, C, H, W = x_nchw.shape
    HW = H * W
    dtype = x_nchw.dtype
    isz = jnp.dtype(dtype).itemsize
    sub = _sublane_granule(dtype)

    tgt, vmem_limit = _budgets()
    if target_block_bytes is not None:
        tgt = int(target_block_bytes)

    x3 = x_nchw.reshape(N, C, HW)                         # free reshape
    gamma = jnp.concatenate([gamma_in, gamma_bn]).astype(jnp.float32)
    beta = jnp.concatenate([beta_in, beta_bn]).astype(jnp.float32)

    # ---------------- primary path: fused single-pass kernel ----------------
    blk_c = _pick_block_channels(C, N * HW * isz, sub, tgt)
    if blk_c is not None:
        nblk = pl.cdiv(C, blk_c)
        c_pad = nblk * blk_c
        g2 = jnp.pad(gamma, (0, c_pad - C)).reshape(c_pad, 1)
        b2 = jnp.pad(beta, (0, c_pad - C)).reshape(c_pad, 1)

        out = pl.pallas_call(
            _make_fused_kernel(half1, blk_c, nblk, N, HW),
            out_shape=jax.ShapeDtypeStruct((N, C, HW), dtype),
            grid=(nblk,),
            in_specs=[
                pl.BlockSpec((N, blk_c, HW), lambda j: (0, j, 0)),
                # params: constant index_map -> fetched once, stay resident
                pl.BlockSpec((c_pad, 1), lambda j: (0, 0)),
                pl.BlockSpec((c_pad, 1), lambda j: (0, 0)),
            ],
            out_specs=pl.BlockSpec((N, blk_c, HW), lambda j: (0, j, 0)),
            compiler_params=pltpu.CompilerParams(
                dimension_semantics=("parallel",),
                vmem_limit_bytes=vmem_limit,
            ),
        )(x3, g2, b2)
        return out.reshape(N, C, H, W)

    # ---------------- fallback: two-phase (stats + apply) -------------------
    row_bytes = HW * isz
    min_blk_c = C if C < sub else sub
    budget_c = (tgt // row_bytes) // sub * sub
    blk_c = C if budget_c >= C else max(min_blk_c, budget_c)
    blk_n = min(N, max(1, tgt // (blk_c * row_bytes)))
    grid = (pl.cdiv(N, blk_n), pl.cdiv(C, blk_c))

    # Phase 1: per-(n, c) sums / sum-of-squares over HW.
    s, q = pl.pallas_call(
        _stats_kernel,
        out_shape=(jax.ShapeDtypeStruct((N, C, 1), jnp.float32),
                   jax.ShapeDtypeStruct((N, C, 1), jnp.float32)),
        grid=grid,
        in_specs=[pl.BlockSpec((blk_n, blk_c, HW), lambda i, j: (i, j, 0))],
        out_specs=(pl.BlockSpec((blk_n, blk_c, 1), lambda i, j: (i, j, 0)),
                   pl.BlockSpec((blk_n, blk_c, 1), lambda i, j: (i, j, 0))),
        compiler_params=pltpu.CompilerParams(
            dimension_semantics=("parallel", "parallel"),
            vmem_limit_bytes=vmem_limit,
        ),
    )(x3)

    # Tiny (N, C) scale/shift math in the wrapper.
    s = s.reshape(N, C)
    q = q.reshape(N, C)
    inv_hw = 1.0 / float(HW)
    inv_nhw = 1.0 / float(N * HW)
    mean_in = s * inv_hw
    var_in = q * inv_hw - mean_in * mean_in
    mean_bn = jnp.sum(s, axis=0) * inv_nhw
    var_bn = jnp.sum(q, axis=0) * inv_nhw - mean_bn * mean_bn
    is_in = (jnp.arange(C) < half1)[None, :]
    mean = jnp.where(is_in, mean_in, mean_bn[None, :])
    var = jnp.maximum(jnp.where(is_in, var_in, var_bn[None, :]), 0.0)
    scale = gamma[None, :] * lax.rsqrt(var + EPS)
    shift = beta[None, :] - mean * scale
    scale3 = scale.reshape(N, C, 1)
    shift3 = shift.reshape(N, C, 1)

    # Phase 2: apply y = x*scale + shift.
    out = pl.pallas_call(
        _apply_kernel,
        out_shape=jax.ShapeDtypeStruct((N, C, HW), dtype),
        grid=grid,
        in_specs=[
            pl.BlockSpec((blk_n, blk_c, HW), lambda i, j: (i, j, 0)),
            pl.BlockSpec((blk_n, blk_c, 1), lambda i, j: (i, j, 0)),
            pl.BlockSpec((blk_n, blk_c, 1), lambda i, j: (i, j, 0)),
        ],
        out_specs=pl.BlockSpec((blk_n, blk_c, HW), lambda i, j: (i, j, 0)),
        compiler_params=pltpu.CompilerParams(
            dimension_semantics=("parallel", "parallel"),
            vmem_limit_bytes=vmem_limit,
        ),
    )(x3, scale3, shift3)
    return out.reshape(N, C, H, W)


# --------------------------------------------------------------------------
# Pure-JAX reference (PyTorch IBN forward, training mode)
# --------------------------------------------------------------------------
def ibn_reference(x, gamma_in, beta_in, gamma_bn, beta_bn, half1):
    x_in = x[:, :half1]
    m = jnp.mean(x_in, axis=(2, 3), keepdims=True)
    v = jnp.mean((x_in - m) ** 2, axis=(2, 3), keepdims=True)
    y_in = (x_in - m) / jnp.sqrt(v + EPS)
    y_in = y_in * gamma_in[None, :, None, None] + beta_in[None, :, None, None]

    x_bn = x[:, half1:]
    m = jnp.mean(x_bn, axis=(0, 2, 3), keepdims=True)
    v = jnp.mean((x_bn - m) ** 2, axis=(0, 2, 3), keepdims=True)
    y_bn = (x_bn - m) / jnp.sqrt(v + EPS)
    y_bn = y_bn * gamma_bn[None, :, None, None] + beta_bn[None, :, None, None]

    return jnp.concatenate([y_in, y_bn], axis=1)


if __name__ == "__main__":
    def make_case(key, N, planes, H, W):
        half1 = planes // 2
        half2 = planes - half1
        ks = jax.random.split(key, 5)
        x = jax.random.normal(ks[0], (N, planes, H, W), dtype=jnp.float32)
        g_in = 1.0 + 0.1 * jax.random.normal(ks[1], (half1,), dtype=jnp.float32)
        b_in = 0.1 * jax.random.normal(ks[2], (half1,), dtype=jnp.float32)
        g_bn = 1.0 + 0.1 * jax.random.normal(ks[3], (half2,), dtype=jnp.float32)
        b_bn = 0.1 * jax.random.normal(ks[4], (half2,), dtype=jnp.float32)
        return x, g_in, b_in, g_bn, b_bn, half1

    key = jax.random.PRNGKey(0)
    k1, k2 = jax.random.split(key)

    # Case 1: required small demo shape (fused single-pass kernel, 1 block).
    args1 = make_case(k1, 2, 4, 16, 16)
    out1 = jax.block_until_ready(ibn_forward(*args1))
    ref1 = ibn_reference(*args1)
    assert out1.shape == (2, 4, 16, 16)
    assert jnp.allclose(out1, ref1, atol=1e-4, rtol=1e-4)

    # Case 2: wider channels -> multi-block fused path (>=2 grid steps,
    # exercises the resident-param dynamic slice and the IN/BN channel mask
    # across blocks).
    args2 = make_case(k2, 2, 32, 16, 16)
    out2 = jax.block_until_ready(ibn_forward(*args2))
    ref2 = ibn_reference(*args2)
    assert jnp.allclose(out2, ref2, atol=1e-4, rtol=1e-4)

    # Case 3: force the two-phase fallback (used when a full-N channel block
    # would not fit the VMEM block budget, e.g. huge N*HW).
    out3 = jax.block_until_ready(
        ibn_forward(*args2, target_block_bytes=8 << 10))
    assert jnp.allclose(out3, ref2, atol=1e-4, rtol=1e-4)

    print("KERNEL_OK")
</pallas_src>

<mosaic_0001>
module attributes {stable_mosaic.version = 11 : i64} {
  func.func @kernel(%arg0: i32, %arg1: memref<2x4x256xf32, #tpu.memory_space<vmem>>, %arg2: memref<4x1xf32, #tpu.memory_space<vmem>>, %arg3: memref<4x1xf32, #tpu.memory_space<vmem>>, %arg4: memref<2x4x256xf32, #tpu.memory_space<vmem>>) attributes {dimension_semantics = [#tpu.dimension_semantics<parallel>], iteration_bounds = array<i64: 1>, scalar_prefetch = 0 : i64, scratch_operands = 0 : i64, tpu.core_type = #tpu.core_type<tc>, window_params = [{transform_indices = @transform_0, window_bounds = array<i64: 2, 4, 256>}, {pipeline_mode = #tpu.pipeline_mode<synchronous>, transform_indices = @transform_1, window_bounds = array<i64: 4, 1>}, {pipeline_mode = #tpu.pipeline_mode<synchronous>, transform_indices = @transform_2, window_bounds = array<i64: 4, 1>}, {transform_indices = @transform_3, window_bounds = array<i64: 2, 4, 256>}]} {
    %c0 = arith.constant 0 : index
    %c0_0 = arith.constant 0 : index
    %c0_1 = arith.constant 0 : index
    %0 = vector.load %arg1[%c0, %c0_0, %c0_1] : memref<2x4x256xf32, #tpu.memory_space<vmem>>, vector<2x4x256xf32>
    %cst = arith.constant dense<0.000000e+00> : vector<2x4xf32>
    %1 = vector.multi_reduction <add>, %0, %cst [2] : vector<2x4x256xf32> to vector<2x4xf32>
    %2 = vector.shape_cast %1 : vector<2x4xf32> to vector<2x4x1xf32>
    %3 = arith.mulf %0, %0 : vector<2x4x256xf32>
    %cst_2 = arith.constant dense<0.000000e+00> : vector<2x4xf32>
    %4 = vector.multi_reduction <add>, %3, %cst_2 [2] : vector<2x4x256xf32> to vector<2x4xf32>
    %5 = vector.shape_cast %4 : vector<2x4xf32> to vector<2x4x1xf32>
    %cst_3 = arith.constant 3.906250e-03 : f32
    %6 = vector.broadcast %cst_3 : f32 to vector<2x4x1xf32>
    %7 = arith.mulf %2, %6 : vector<2x4x1xf32>
    %cst_4 = arith.constant 3.906250e-03 : f32
    %8 = vector.broadcast %cst_4 : f32 to vector<2x4x1xf32>
    %9 = arith.mulf %5, %8 : vector<2x4x1xf32>
    %10 = arith.mulf %7, %7 : vector<2x4x1xf32>
    %11 = arith.subf %9, %10 : vector<2x4x1xf32>
    %cst_5 = arith.constant dense<0.000000e+00> : vector<4x1xf32>
    %12 = vector.multi_reduction <add>, %2, %cst_5 [0] : vector<2x4x1xf32> to vector<4x1xf32>
    %13 = vector.shape_cast %12 : vector<4x1xf32> to vector<1x4x1xf32>
    %cst_6 = arith.constant dense<0.000000e+00> : vector<4x1xf32>
    %14 = vector.multi_reduction <add>, %5, %cst_6 [0] : vector<2x4x1xf32> to vector<4x1xf32>
    %15 = vector.shape_cast %14 : vector<4x1xf32> to vector<1x4x1xf32>
    %cst_7 = arith.constant 0.001953125 : f32
    %16 = vector.broadcast %cst_7 : f32 to vector<1x4x1xf32>
    %17 = arith.mulf %13, %16 : vector<1x4x1xf32>
    %cst_8 = arith.constant 0.001953125 : f32
    %18 = vector.broadcast %cst_8 : f32 to vector<1x4x1xf32>
    %19 = arith.mulf %15, %18 : vector<1x4x1xf32>
    %20 = arith.mulf %17, %17 : vector<1x4x1xf32>
    %21 = arith.subf %19, %20 : vector<1x4x1xf32>
    %c4_i32 = arith.constant 4 : i32
    %22 = arith.muli %arg0, %c4_i32 : i32
    %23 = tpu.iota {dimensions = array<i32: 0>} : vector<4x1xi32>
    %24 = vector.broadcast %22 : i32 to vector<4x1xi32>
    %25 = arith.addi %24, %23 : vector<4x1xi32>
    %c2_i32 = arith.constant 2 : i32
    %26 = vector.broadcast %c2_i32 : i32 to vector<4x1xi32>
    %27 = arith.cmpi slt, %25, %26 : vector<4x1xi32>
    %28 = vector.shape_cast %27 : vector<4x1xi1> to vector<1x4x1xi1>
    %29 = vector.shape_cast %28 : vector<1x4x1xi1> to vector<1x4x1xi1>
    %30 = vector.broadcast %29 : vector<1x4x1xi1> to vector<2x4x1xi1>
    %31 = vector.shape_cast %17 : vector<1x4x1xf32> to vector<1x4x1xf32>
    %32 = vector.broadcast %31 : vector<1x4x1xf32> to vector<2x4x1xf32>
    %33 = arith.select %30, %7, %32 : vector<2x4x1xi1>, vector<2x4x1xf32>
    %34 = vector.shape_cast %28 : vector<1x4x1xi1> to vector<1x4x1xi1>
    %35 = vector.broadcast %34 : vector<1x4x1xi1> to vector<2x4x1xi1>
    %36 = vector.shape_cast %21 : vector<1x4x1xf32> to vector<1x4x1xf32>
    %37 = vector.broadcast %36 : vector<1x4x1xf32> to vector<2x4x1xf32>
    %38 = arith.select %35, %11, %37 : vector<2x4x1xi1>, vector<2x4x1xf32>
    %cst_9 = arith.constant 0.000000e+00 : f32
    %39 = vector.broadcast %cst_9 : f32 to vector<2x4x1xf32>
    %40 = arith.maximumf %38, %39 : vector<2x4x1xf32>
    %c0_10 = arith.constant 0 : index
    %c0_11 = arith.constant 0 : index
    %41 = vector.load %arg2[%c0_10, %c0_11] : memref<4x1xf32, #tpu.memory_space<vmem>>, vector<4x1xf32>
    %c0_12 = arith.constant 0 : index
    %c0_13 = arith.constant 0 : index
    %42 = vector.load %arg3[%c0_12, %c0_13] : memref<4x1xf32, #tpu.memory_space<vmem>>, vector<4x1xf32>
    %43 = vector.shape_cast %41 : vector<4x1xf32> to vector<1x4x1xf32>
    %cst_14 = arith.constant 9.99999974E-6 : f32
    %44 = vector.broadcast %cst_14 : f32 to vector<2x4x1xf32>
    %45 = arith.addf %40, %44 : vector<2x4x1xf32>
    %46 = math.rsqrt %45 : vector<2x4x1xf32>
    %47 = vector.broadcast %43 : vector<1x4x1xf32> to vector<2x4x1xf32>
    %48 = arith.mulf %47, %46 : vector<2x4x1xf32>
    %49 = vector.shape_cast %42 : vector<4x1xf32> to vector<1x4x1xf32>
    %50 = arith.mulf %33, %48 : vector<2x4x1xf32>
    %51 = vector.broadcast %49 : vector<1x4x1xf32> to vector<2x4x1xf32>
    %52 = arith.subf %51, %50 : vector<2x4x1xf32>
    %53 = vector.broadcast %48 : vector<2x4x1xf32> to vector<2x4x256xf32>
    %54 = arith.mulf %0, %53 : vector<2x4x256xf32>
    %55 = vector.broadcast %52 : vector<2x4x1xf32> to vector<2x4x256xf32>
    %56 = arith.addf %54, %55 : vector<2x4x256xf32>
    %c0_15 = arith.constant 0 : index
    %c0_16 = arith.constant 0 : index
    %c0_17 = arith.constant 0 : index
    %57 = vector.load %arg4[%c0_15, %c0_16, %c0_17] : memref<2x4x256xf32, #tpu.memory_space<vmem>>, vector<2x4x256xf32>
    tpu.vector_store %arg4[%c0_15, %c0_16, %c0_17], %56 {strides = array<i32>} : memref<2x4x256xf32, #tpu.memory_space<vmem>>, vector<2x4x256xf32>,
    return
  }
  func.func @transform_0(%arg0: i32) -> (i32, i32, i32) {
    %c0_i32 = arith.constant 0 : i32
    %c0_i32_0 = arith.constant 0 : i32
    %c0_i32_1 = arith.constant 0 : i32
    return %c0_i32, %arg0, %c0_i32_0 : i32, i32, i32
  }
  func.func @transform_1(%arg0: i32) -> (i32, i32) {
    %c0_i32 = arith.constant 0 : i32
    %c0_i32_0 = arith.constant 0 : i32
    %c0_i32_1 = arith.constant 0 : i32
    return %c0_i32, %c0_i32_0 : i32, i32
  }
  func.func @transform_2(%arg0: i32) -> (i32, i32) {
    %c0_i32 = arith.constant 0 : i32
    %c0_i32_0 = arith.constant 0 : i32
    %c0_i32_1 = arith.constant 0 : i32
    return %c0_i32, %c0_i32_0 : i32, i32
  }
  func.func @transform_3(%arg0: i32) -> (i32, i32, i32) {
    %c0_i32 = arith.constant 0 : i32
    %c0_i32_0 = arith.constant 0 : i32
    %c0_i32_1 = arith.constant 0 : i32
    return %c0_i32, %arg0, %c0_i32_0 : i32, i32, i32
  }
}

</mosaic_0001>

<llo_original>
// kernel: tpu_custom_call.1
$region0: #{tpu_custom_call.1}
  #allocation0 [shape = 'u32[]', space=smem, size = 0x4, offset = 0x4, fixed_abs, tag = 'smem constant byte address 0x4 - core index']
  #allocation1 [shape = 'u32[144,128]{1,0:T(1,128)}', space=vmem, size = 0x12000, scoped, tag = 'internal scratch']
  %s0 = inlined_call_operand.hbm [shape: f32[2,4,256], index: 0, kind: input, shape index: {}]
  %s1 = inlined_call_operand.vmem [shape: f32[4,1], index: 1, kind: input, shape index: {}]
  %s2 = inlined_call_operand.vmem [shape: f32[4,1], index: 2, kind: input, shape index: {}]
  %s3 = inlined_call_operand.hbm [shape: f32[2,4,256], index: 3, kind: output, shape index: {}]
  %s4 = sld [smem:[#allocation0]]
  $region26: #{tpu_custom_call.1} parent=0
    _
  %s6 = ssub.s32 1, %s4
  %s7 = scalar_select 0, %s6, %s4
  $region1: #{tpu_custom_call.1} parent=0
    #allocation2 [shape = 'u8[8192]{0}', space=vmem, size = 0x2000, scoped, tag = 'input window, operand 0, single buffered']
    #allocation3 [shape = 's32[1]{0}', space=sflag, size = 0x4, scoped, tag = 'scoped memory for tpu_custom_call.1']
    #allocation4 [shape = 's32[1]{0}', space=sflag, size = 0x4, scoped, tag = 'scoped memory for tpu_custom_call.1']
    #allocation5 [shape = 'u8[8192]{0}', space=vmem, size = 0x2000, scoped, tag = 'output window, operand 0, single buffered']
    %8 = vsyncpa [#allocation3], 0
    %9 = vsyncpa [#allocation4], 0
    // Predicated region
    $region2: #{tpu_custom_call.1} parent=1 // pred_check
      _
    $region3: #{tpu_custom_call.1} parent=1 // pred_check_branch
      %11 = sbr.rel (0) target = $region5
    $region4: #{tpu_custom_call.1} parent=1 // pred_region
      %s13 = ssub.s32 256, 256
      %14 = vsyncadd [#allocation3], %s13
      %s15 = sshll.u32 [#allocation2], 4
      %s16 = int_to_ptr.vmem [resolvable:$true] %s15
      %21 = dma.hbm_to_vmem [thread:$0]  %s0, 256, %s16, [#allocation3], 128, 128, 8
    $region5: #{tpu_custom_call.1} parent=1 // pred_fallthru
      _
    // Predicated region
    $region6: #{tpu_custom_call.1} parent=1 // pred_check
      _
    $region7: #{tpu_custom_call.1} parent=1 // pred_check_branch
      %23 = sbr.rel (0) target = $region9
    $region8: #{tpu_custom_call.1} parent=1 // pred_region
      _
    $region9: #{tpu_custom_call.1} parent=1 // pred_fallthru
      _
    // Predicated region
    $region10: #{tpu_custom_call.1} parent=1 // pred_check
      _
    $region11: #{tpu_custom_call.1} parent=1 // pred_check_branch
      %25 = sbr.rel (0) target = $region13
    $region12: #{tpu_custom_call.1} parent=1 // pred_region
      _
    $region13: #{tpu_custom_call.1} parent=1 // pred_fallthru
      _
    // Predicated region
    $region14: #{tpu_custom_call.1} parent=1 // pred_check
      _
    $region15: #{tpu_custom_call.1} parent=1 // pred_check_branch
      %27 = sbr.rel (0) target = $region17
    $region16: #{tpu_custom_call.1} parent=1 // pred_region
      %28 = dma.done [#allocation3], 256
    $region17: #{tpu_custom_call.1} parent=1 // pred_fallthru
      _
    %v29 = vld [vmem:[#allocation2] sm:$0xff]
    %v30 = vld [vmem:[#allocation2 + $0x8] sm:$0xff]
    %v33 = vcombine.high %v29, %v29
    %v34 = vcombine.high %v30, %v30
    %vm37 = vcmask 1043456
    %v38 = vsel %vm37, %v29, 0.0
    %v39 = vsel %vm37, %v33, 0.0
    %v40 = vadd.f32 %v38, %v39
    %41 = vadd.xlane.f32.xlu0 %v40
    %v42 = vpop.xlane.xlu0 %41
    %v43 = vsel %vm37, %v30, 0.0
    %v44 = vsel %vm37, %v34, 0.0
    %v45 = vadd.f32 %v43, %v44
    %46 = vadd.xlane.f32.xlu0 %v45
    %v47 = vpop.xlane.xlu0 %46
    %v48 = vmul.f32 %v29, %v29
    %v49 = vmul.f32 %v30, %v30
    %v52 = vcombine.high %v48, %v48
    %v53 = vcombine.high %v49, %v49
    %v56 = vsel %vm37, %v48, 0.0
    %v57 = vsel %vm37, %v52, 0.0
    %v58 = vadd.f32 %v56, %v57
    %59 = vadd.xlane.f32.xlu0 %v58
    %v60 = vpop.xlane.xlu0 %59
    %v61 = vsel %vm37, %v49, 0.0
    %v62 = vsel %vm37, %v53, 0.0
    %v63 = vadd.f32 %v61, %v62
    %64 = vadd.xlane.f32.xlu0 %v63
    %v65 = vpop.xlane.xlu0 %64
    %v66 = vmul.f32 %v42, 0.00390625
    %v67 = vmul.f32 %v47, 0.00390625
    %v68 = vmul.f32 %v60, 0.00390625
    %v69 = vmul.f32 %v65, 0.00390625
    %v70 = vmul.f32 %v66, %v66
    %v71 = vmul.f32 %v67, %v67
    %v72 = vsub.f32 %v68, %v70
    %v73 = vsub.f32 %v69, %v71
    %v74 = vsel %vm37, %v42, 0.0
    %v75 = vsel %vm37, %v47, 0.0
    %v76 = vadd.f32 %v74, %v75
    %v77 = vsel %vm37, %v60, 0.0
    %v78 = vsel %vm37, %v65, 0.0
    %v79 = vadd.f32 %v77, %v78
    %v80 = vmul.f32 %v76, 0.001953125
    %v81 = vmul.f32 %v79, 0.001953125
    %v82 = vmul.f32 %v80, %v80
    %v83 = vsub.f32 %v81, %v82
    %s84 = smul.u32 0, 4
    %v85 = vlaneseq
    %v86 = vshrl.u32 %v85, 7
    %v87 = vstv %s84
    %v88 = vadd.s32 %v87, %v86
    %vm89 = vcmp.lt.s32.totalorder %v88, 2
    %v90 = vsel %vm89, 1, 0
    %vm91 = vcmp.eq.s32.totalorder %v90, 1
    %v92 = vsel %vm91, %v66, %v80
    %v93 = vsel %vm91, %v67, %v80
    %v94 = vsel %vm91, %v72, %v83
    %v95 = vsel %vm91, %v73, %v83
    %v96 = vmax.f32 %v94, 0.0
    %v97 = vmax.f32 %v95, 0.0
    %v98 = vld [vmem:[%s1] sm:$0xf]
    %v99 = vld [vmem:[%s2] sm:$0xf]
    %v100 = vadd.f32 %v96, 1e-05
    %v101 = vadd.f32 %v97, 1e-05
    %v102 = vrsqrt.pop %v100
    %v103 = vrsqrt.pop %v101
    %v104 = vmul.f32 %v98, %v102
    %v105 = vmul.f32 %v98, %v103
    %v106 = vmul.f32 %v92, %v104
    %v107 = vmul.f32 %v93, %v105
    %v108 = vsub.f32 %v99, %v106
    %v109 = vsub.f32 %v99, %v107
    %111 = vset.pattern.permute.xlu0 0
    %112 = vperm.xlu0 %111, %v104
    %v113 = vpop.permute.xlu0 %112
    %115 = vset.pattern.permute.xlu0 0
    %116 = vperm.xlu0 %115, %v105
    %v117 = vpop.permute.xlu0 %116
    %v119 = vunpack.c.l.s4 839922192
    %v120 = vunpack.c.0.s8 %v119
    %v121 = vlaneseq
    %v122 = vshrl.u32 %v121, 7
    %v123 = vsub.s32 %v120, %v122
    %v124 = vrot.slane %v113, %v123
    %v126 = vunpack.c.l.s4 839922192
    %v127 = vunpack.c.0.s8 %v126
    %v128 = vlaneseq
    %v129 = vshrl.u32 %v128, 7
    %v130 = vsub.s32 %v127, %v129
    %v131 = vrot.slane %v117, %v130
    %v134 = vmul.f32 %v29, %v124
    %v135 = vmul.f32 %v30, %v131
    %137 = vset.pattern.permute.xlu0 0
    %138 = vperm.xlu0 %137, %v108
    %v139 = vpop.permute.xlu0 %138
    %141 = vset.pattern.permute.xlu0 0
    %142 = vperm.xlu0 %141, %v109
    %v143 = vpop.permute.xlu0 %142
    %v145 = vunpack.c.l.s4 839922192
    %v146 = vunpack.c.0.s8 %v145
    %v147 = vlaneseq
    %v148 = vshrl.u32 %v147, 7
    %v149 = vsub.s32 %v146, %v148
    %v150 = vrot.slane %v139, %v149
    %v152 = vunpack.c.l.s4 839922192
    %v153 = vunpack.c.0.s8 %v152
    %v154 = vlaneseq
    %v155 = vshrl.u32 %v154, 7
    %v156 = vsub.s32 %v153, %v155
    %v157 = vrot.slane %v143, %v156
    %v160 = vadd.f32 %v134, %v150
    %v161 = vadd.f32 %v135, %v157
    %162 = vst [vmem:[#allocation5] sm:$0xff] %v160
    %163 = vst [vmem:[#allocation5 + $0x8] sm:$0xff] %v161
    // Predicated region
    $region18: #{tpu_custom_call.1} parent=1 // pred_check
      _
    $region19: #{tpu_custom_call.1} parent=1 // pred_check_branch
      %165 = sbr.rel (0) target = $region21
    $region20: #{tpu_custom_call.1} parent=1 // pred_region
      %s167 = ssub.s32 256, 256
      %168 = vsyncadd [#allocation4], %s167
      %s169 = sshll.u32 [#allocation5], 4
      %s170 = int_to_ptr.vmem [resolvable:$true] %s169
      %175 = dma.vmem_to_hbm [thread:$0]  %s170, 256, %s3, [#allocation4], 128, 128, 8
    $region21: #{tpu_custom_call.1} parent=1 // pred_fallthru
      _
    // Predicated region
    $region22: #{tpu_custom_call.1} parent=1 // pred_check
      _
    $region23: #{tpu_custom_call.1} parent=1 // pred_check_branch
      %177 = sbr.rel (0) target = $region25
    $region24: #{tpu_custom_call.1} parent=1 // pred_region
      %178 = dma.done [#allocation4], 256
    $region25: #{tpu_custom_call.1} parent=1 // pred_fallthru
      _
    %179 = vsyncpa [#allocation3], 1
    %180 = vsyncpa [#allocation4], 1

</llo_original>
